<compile_context>
chip_gen: v5e
topology: v5e:2x2
jax: 0.10.0
libtpu: 0.0.40
codegen_flags: <defaults>
</compile_context>

<pallas_src>
import functools

import jax
import jax.numpy as jnp
from jax.experimental import pallas as pl
from jax.experimental.pallas import tpu as pltpu

LEN_DISCRETE_CODE = 5
IN_FEATURES = 1024
HIDDEN = 128
OUT_PAD = 128          # fc1 output padded to a lane-dense 128 columns
BN_EPS = 1e-5
LEAKY_SLOPE = 0.2
STATS_ROWS = 8         # sublane-aligned stats tile: row0 = sum, row1 = sum(y^2)

TILE_B_K1 = 1024       # kernel-1 batch tile (x is 4 KiB/row; safe on v7x VMEM)
TILE_B_K2 = 2048       # kernel-2 batch tile (~1.5 KiB/row -> few, big steps)
FUSED_MAX_B = 512      # fused single-kernel path below/at this batch size
VMEM_LIMIT = 40 * 1024 * 1024   # <= ~40 MiB scoped: safe on v5e/v6e/v7x


def _round_up(n, m):
    return ((n + m - 1) // m) * m


def _balanced_tiles(batch, max_tile, min_tiles):
    """Balanced batch tiling: num = cdiv(B, max_tile) (>= min_tiles),
    tile = round_up(cdiv(B, num), 16)."""
    num = max(min_tiles, pl.cdiv(batch, max_tile))
    tile = _round_up(pl.cdiv(batch, num), 16)
    num = pl.cdiv(batch, tile)
    return num, tile


# ------------------------- fused single-kernel path --------------------------
def _fused_kernel(x_ref, w1_ref, gamma_ref, beta_ref, w2_ref, b2_ref,
                  a_ref, b_ref):
    # Whole (B, 1024) batch in VMEM; bf16 MXU inputs, f32 accumulation.
    xb = x_ref[...].astype(jnp.bfloat16)                         # (B, 1024)
    y = jnp.dot(xb, w1_ref[...],
                preferred_element_type=jnp.float32)              # (B, 128) f32
    # Train-mode BatchNorm stats over the (exact-shape) batch.
    n = jnp.float32(x_ref.shape[0])
    mean = jnp.sum(y, axis=0, keepdims=True) / n                 # (1, 128)
    var = jnp.maximum(jnp.sum(y * y, axis=0, keepdims=True) / n - mean * mean,
                      0.0)                                       # biased var
    scale = gamma_ref[...] * jax.lax.rsqrt(var + BN_EPS)
    shift = beta_ref[...] - mean * scale
    z = y * scale + shift                                        # folded BN FMA
    a = jnp.where(z > 0, z, LEAKY_SLOPE * z)                     # LeakyReLU(0.2)
    a_ref[...] = a
    b_ref[...] = jnp.dot(a.astype(jnp.bfloat16), w2_ref[...],
                         preferred_element_type=jnp.float32) + b2_ref[...]


# --------------- kernel 1: fc (1024 -> 128) + per-tile partial stats ---------
def _fc_stats_kernel(x_ref, w1_ref, y_ref, stats_ref, *, n_valid, tile_b):
    xb = x_ref[...].astype(jnp.bfloat16)                         # (TB, 1024)
    y = jnp.dot(xb, w1_ref[...],
                preferred_element_type=jnp.float32)              # (TB, 128) f32
    # bf16 intermediate halves y HBM traffic; stats use the f32 accumulator.
    y_ref[...] = y.astype(jnp.bfloat16)

    # Mask the tail tile's out-of-bounds rows (no wrapper-side jnp.pad of x).
    row = (jax.lax.broadcasted_iota(jnp.int32, y.shape, 0)
           + pl.program_id(0) * tile_b)
    ym = jnp.where(row < n_valid, y, 0.0)
    s = jnp.sum(ym, axis=0, keepdims=True)                       # (1, 128)
    sq = jnp.sum(ym * ym, axis=0, keepdims=True)                 # (1, 128)
    r = jax.lax.broadcasted_iota(jnp.int32, (STATS_ROWS, HIDDEN), 0)
    stats_ref[...] = jnp.where(r == 0, s, jnp.where(r == 1, sq, 0.0))


# ------ kernel 2: stats reduce + folded BN + LeakyReLU + fc1 (128 -> 128pad) --
def _bn_act_fc1_kernel(y_ref, stats_ref, gamma_ref, beta_ref, w2_ref, b2_ref,
                       a_ref, b_ref, *, n_valid):
    # Cross-tile stats reduction done here (redundantly per grid step: a few
    # vregs of VPU work, free under the DMA-bound regime; removes XLA glue).
    stats = stats_ref[...]                                       # (nt*8, 128)
    r = jax.lax.broadcasted_iota(jnp.int32, stats.shape, 0) % STATS_ROWS
    total_sum = jnp.sum(jnp.where(r == 0, stats, 0.0), axis=0, keepdims=True)
    total_sq = jnp.sum(jnp.where(r == 1, stats, 0.0), axis=0, keepdims=True)
    n = jnp.float32(n_valid)
    mean = total_sum / n
    var = jnp.maximum(total_sq / n - mean * mean, 0.0)           # biased var
    scale = gamma_ref[...] * jax.lax.rsqrt(var + BN_EPS)         # (1, 128)
    shift = beta_ref[...] - mean * scale

    y = y_ref[...].astype(jnp.float32)                           # (TB2, 128)
    z = y * scale + shift
    a = jnp.where(z > 0, z, LEAKY_SLOPE * z)
    a_ref[...] = a
    b_ref[...] = jnp.dot(a.astype(jnp.bfloat16), w2_ref[...],
                         preferred_element_type=jnp.float32) + b2_ref[...]


def latent_predictor(x, w1_t, b1, gamma, beta, w2_t, b2, *,
                     fused_max_b=FUSED_MAX_B):
    """x: (B, 1024) f32. Weights pre-transposed: w1_t (1024,128), w2_t (128,5).

    Returns (a, b) = ((B,128), (B,5)) f32, matching the PyTorch forward with
    training-mode BatchNorm1d (batch statistics, biased variance).
    """
    del b1  # exactly cancelled by the train-mode BN mean subtraction

    B = x.shape[0]
    gamma = gamma.reshape(1, HIDDEN).astype(jnp.float32)
    beta = beta.reshape(1, HIDDEN).astype(jnp.float32)
    w1_bf = w1_t.astype(jnp.bfloat16)
    # Lane-dense fc1 weights: single jnp.pad, (128,5)->(128,128), (1,5)->(1,128).
    w2_pad = jnp.pad(
        w2_t, ((0, 0), (0, OUT_PAD - LEN_DISCRETE_CODE))).astype(jnp.bfloat16)
    b2_pad = jnp.pad(
        b2.reshape(1, LEN_DISCRETE_CODE),
        ((0, 0), (0, OUT_PAD - LEN_DISCRETE_CODE))).astype(jnp.float32)

    # ---------------------- fused single-kernel path -------------------------
    if B <= fused_max_b:
        flops = (2 * B * IN_FEATURES * HIDDEN + 2 * B * HIDDEN * OUT_PAD
                 + 12 * B * HIDDEN)
        bytes_acc = (B * IN_FEATURES * 4 + IN_FEATURES * HIDDEN * 2
                     + HIDDEN * OUT_PAD * 2 + B * HIDDEN * 4 + B * OUT_PAD * 4)
        a, b_out = pl.pallas_call(
            _fused_kernel,
            out_shape=(jax.ShapeDtypeStruct((B, HIDDEN), jnp.float32),
                       jax.ShapeDtypeStruct((B, OUT_PAD), jnp.float32)),
            compiler_params=pltpu.CompilerParams(vmem_limit_bytes=VMEM_LIMIT),
            cost_estimate=pl.CostEstimate(flops=flops, transcendentals=HIDDEN,
                                          bytes_accessed=bytes_acc),
        )(x, w1_bf, gamma, beta, w2_pad, b2_pad)
        return a, b_out[:, :LEN_DISCRETE_CODE]

    # ---------------------- multi-tile two-pass path -------------------------
    # >= 2 tiles so ("parallel",) batch grid can split across v7x TensorCores.
    nt1, tb1 = _balanced_tiles(B, TILE_B_K1, min_tiles=2)
    nt2, tb2 = _balanced_tiles(B, TILE_B_K2, min_tiles=2)

    cparams = pltpu.CompilerParams(
        dimension_semantics=("parallel",),
        vmem_limit_bytes=VMEM_LIMIT,
    )

    # pass 1: y = x @ w1 (bf16 MXU, f32 acc) + per-tile BN partial stats.
    y, stats = pl.pallas_call(
        functools.partial(_fc_stats_kernel, n_valid=B, tile_b=tb1),
        grid=(nt1,),
        out_shape=(
            jax.ShapeDtypeStruct((B, HIDDEN), jnp.bfloat16),
            jax.ShapeDtypeStruct((nt1 * STATS_ROWS, HIDDEN), jnp.float32),
        ),
        in_specs=[
            pl.BlockSpec((tb1, IN_FEATURES), lambda i: (i, 0)),
            pl.BlockSpec((IN_FEATURES, HIDDEN), lambda i: (0, 0)),  # resident
        ],
        out_specs=(
            pl.BlockSpec((tb1, HIDDEN), lambda i: (i, 0)),
            pl.BlockSpec((STATS_ROWS, HIDDEN), lambda i: (i, 0)),
        ),
        compiler_params=cparams,
        cost_estimate=pl.CostEstimate(
            flops=2 * B * IN_FEATURES * HIDDEN,
            transcendentals=0,
            bytes_accessed=(B * IN_FEATURES * 4 + IN_FEATURES * HIDDEN * 2
                            + B * HIDDEN * 2 + nt1 * STATS_ROWS * HIDDEN * 4)),
    )(x, w1_bf)

    # pass 2: in-kernel stats reduce + folded BN + LeakyReLU + fc1.
    a, b_out = pl.pallas_call(
        functools.partial(_bn_act_fc1_kernel, n_valid=B),
        grid=(nt2,),
        out_shape=(
            jax.ShapeDtypeStruct((B, HIDDEN), jnp.float32),
            jax.ShapeDtypeStruct((B, OUT_PAD), jnp.float32),
        ),
        in_specs=[
            pl.BlockSpec((tb2, HIDDEN), lambda i: (i, 0)),
            pl.BlockSpec((nt1 * STATS_ROWS, HIDDEN), lambda i: (0, 0)),
            pl.BlockSpec((1, HIDDEN), lambda i: (0, 0)),
            pl.BlockSpec((1, HIDDEN), lambda i: (0, 0)),
            pl.BlockSpec((HIDDEN, OUT_PAD), lambda i: (0, 0)),
            pl.BlockSpec((1, OUT_PAD), lambda i: (0, 0)),
        ],
        out_specs=(
            pl.BlockSpec((tb2, HIDDEN), lambda i: (i, 0)),
            pl.BlockSpec((tb2, OUT_PAD), lambda i: (i, 0)),
        ),
        compiler_params=cparams,
        cost_estimate=pl.CostEstimate(
            flops=2 * B * HIDDEN * OUT_PAD + 10 * B * HIDDEN,
            transcendentals=HIDDEN,
            bytes_accessed=(B * HIDDEN * 2 + B * HIDDEN * 4 + B * OUT_PAD * 4
                            + HIDDEN * OUT_PAD * 2)),
    )(y, stats, gamma, beta, w2_pad, b2_pad)

    return a, b_out[:, :LEN_DISCRETE_CODE]


# ---------------- pure-JAX reference (f32, includes b1 to prove cancellation) -
def latent_predictor_ref(x, w1_t, b1, gamma, beta, w2_t, b2):
    y = x @ w1_t + b1
    mean = jnp.mean(y, axis=0, keepdims=True)
    var = jnp.mean((y - mean) ** 2, axis=0, keepdims=True)       # biased
    z = gamma * (y - mean) * jax.lax.rsqrt(var + BN_EPS) + beta
    a = jnp.where(z > 0, z, LEAKY_SLOPE * z)
    b = a @ w2_t + b2
    return a, b


def init_params(key):
    """Deterministic synthetic parameters (shapes from the module __init__)."""
    k1, k2, k3, k4 = jax.random.split(key, 4)
    w1_t = jax.random.normal(k1, (IN_FEATURES, HIDDEN), jnp.float32) * 0.02
    b1 = jax.random.normal(k2, (1, HIDDEN), jnp.float32) * 0.01
    gamma = jnp.ones((1, HIDDEN), jnp.float32)   # BatchNorm1d default init
    beta = jnp.zeros((1, HIDDEN), jnp.float32)
    w2_t = jax.random.normal(k3, (HIDDEN, LEN_DISCRETE_CODE), jnp.float32) * 0.05
    b2 = jax.random.normal(k4, (1, LEN_DISCRETE_CODE), jnp.float32) * 0.01
    return w1_t, b1, gamma, beta, w2_t, b2


if __name__ == "__main__":
    key = jax.random.PRNGKey(0)
    k_x, k_p, k_x2 = jax.random.split(key, 3)
    params = init_params(k_p)

    # Small batch (not a multiple of 8): exercises the fused single-kernel path.
    B = 12
    x = jax.random.normal(k_x, (B, IN_FEATURES), jnp.float32)
    a, b = jax.jit(latent_predictor)(x, *params)
    jax.block_until_ready((a, b))
    assert a.shape == (B, HIDDEN) and a.dtype == jnp.float32
    assert b.shape == (B, LEN_DISCRETE_CODE) and b.dtype == jnp.float32
    a_ref, b_ref = latent_predictor_ref(x, *params)
    assert jnp.allclose(a, a_ref, atol=5e-2, rtol=5e-2), "fused activation mismatch"
    assert jnp.allclose(b, b_ref, atol=5e-2, rtol=5e-2), "fused logits mismatch"

    # Batch above the fused threshold and not a tile multiple: exercises the
    # two-pass multi-tile path (tail-row masking, in-kernel stats reduction).
    B2 = 520
    x2 = jax.random.normal(k_x2, (B2, IN_FEATURES), jnp.float32)
    a2, b2_out = jax.jit(latent_predictor)(x2, *params)
    jax.block_until_ready((a2, b2_out))
    assert a2.shape == (B2, HIDDEN) and b2_out.shape == (B2, LEN_DISCRETE_CODE)
    a2_ref, b2_ref = latent_predictor_ref(x2, *params)
    assert jnp.allclose(a2, a2_ref, atol=5e-2, rtol=5e-2), "tiled activation mismatch"
    assert jnp.allclose(b2_out, b2_ref, atol=5e-2, rtol=5e-2), "tiled logits mismatch"

    print("KERNEL_OK")
</pallas_src>

<mosaic_0001>
module attributes {stable_mosaic.version = 11 : i64} {
  func.func @_fused_kernel(%arg0: memref<12x1024xf32, #tpu.memory_space<vmem>>, %arg1: memref<1024x128xbf16, #tpu.memory_space<vmem>>, %arg2: memref<1x128xf32, #tpu.memory_space<vmem>>, %arg3: memref<1x128xf32, #tpu.memory_space<vmem>>, %arg4: memref<128x128xbf16, #tpu.memory_space<vmem>>, %arg5: memref<1x128xf32, #tpu.memory_space<vmem>>, %arg6: memref<12x128xf32, #tpu.memory_space<vmem>>, %arg7: memref<12x128xf32, #tpu.memory_space<vmem>>) attributes {dimension_semantics = [], scalar_prefetch = 0 : i64, scratch_operands = 0 : i64, tpu.core_type = #tpu.core_type<tc>} {
    %c0 = arith.constant 0 : index
    %c0_0 = arith.constant 0 : index
    %0 = vector.load %arg0[%c0, %c0_0] : memref<12x1024xf32, #tpu.memory_space<vmem>>, vector<12x1024xf32>
    %1 = arith.truncf %0 : vector<12x1024xf32> to vector<12x1024xbf16>
    %c0_1 = arith.constant 0 : index
    %c0_2 = arith.constant 0 : index
    %2 = vector.load %arg1[%c0_1, %c0_2] : memref<1024x128xbf16, #tpu.memory_space<vmem>>, vector<1024x128xbf16>
    %cst = arith.constant dense<0.000000e+00> : vector<12x128xf32>
    %3 = tpu.matmul %1, %2, %cst {dimension_numbers = #tpu.dot_dimension_numbers<[1], [0], [0], [1], [0, 0, 1, 1], [], []>} : vector<12x1024xbf16>, vector<1024x128xbf16>, vector<12x128xf32> -> vector<12x128xf32>
    %cst_3 = arith.constant dense<0.000000e+00> : vector<128xf32>
    %4 = vector.multi_reduction <add>, %3, %cst_3 [0] : vector<12x128xf32> to vector<128xf32>
    %5 = vector.shape_cast %4 : vector<128xf32> to vector<1x128xf32>
    %cst_4 = arith.constant 1.200000e+01 : f32
    %6 = vector.broadcast %cst_4 : f32 to vector<1x128xf32>
    %7 = arith.divf %5, %6 : vector<1x128xf32>
    %8 = arith.mulf %3, %3 : vector<12x128xf32>
    %cst_5 = arith.constant dense<0.000000e+00> : vector<128xf32>
    %9 = vector.multi_reduction <add>, %8, %cst_5 [0] : vector<12x128xf32> to vector<128xf32>
    %10 = vector.shape_cast %9 : vector<128xf32> to vector<1x128xf32>
    %cst_6 = arith.constant 1.200000e+01 : f32
    %11 = vector.broadcast %cst_6 : f32 to vector<1x128xf32>
    %12 = arith.divf %10, %11 : vector<1x128xf32>
    %13 = arith.mulf %7, %7 : vector<1x128xf32>
    %14 = arith.subf %12, %13 : vector<1x128xf32>
    %cst_7 = arith.constant 0.000000e+00 : f32
    %15 = vector.broadcast %cst_7 : f32 to vector<1x128xf32>
    %16 = arith.maximumf %14, %15 : vector<1x128xf32>
    %c0_8 = arith.constant 0 : index
    %c0_9 = arith.constant 0 : index
    %17 = vector.load %arg2[%c0_8, %c0_9] : memref<1x128xf32, #tpu.memory_space<vmem>>, vector<1x128xf32>
    %cst_10 = arith.constant 9.99999974E-6 : f32
    %18 = vector.broadcast %cst_10 : f32 to vector<1x128xf32>
    %19 = arith.addf %16, %18 : vector<1x128xf32>
    %20 = math.rsqrt %19 : vector<1x128xf32>
    %21 = arith.mulf %17, %20 : vector<1x128xf32>
    %c0_11 = arith.constant 0 : index
    %c0_12 = arith.constant 0 : index
    %22 = vector.load %arg3[%c0_11, %c0_12] : memref<1x128xf32, #tpu.memory_space<vmem>>, vector<1x128xf32>
    %23 = arith.mulf %7, %21 : vector<1x128xf32>
    %24 = arith.subf %22, %23 : vector<1x128xf32>
    %25 = vector.broadcast %21 : vector<1x128xf32> to vector<12x128xf32>
    %26 = arith.mulf %3, %25 : vector<12x128xf32>
    %27 = vector.broadcast %24 : vector<1x128xf32> to vector<12x128xf32>
    %28 = arith.addf %26, %27 : vector<12x128xf32>
    %cst_13 = arith.constant 0.000000e+00 : f32
    %29 = vector.broadcast %cst_13 : f32 to vector<12x128xf32>
    %30 = arith.cmpf ogt, %28, %29 : vector<12x128xf32>
    %cst_14 = arith.constant 2.000000e-01 : f32
    %31 = vector.broadcast %cst_14 : f32 to vector<12x128xf32>
    %32 = arith.mulf %31, %28 : vector<12x128xf32>
    %33 = arith.select %30, %28, %32 : vector<12x128xi1>, vector<12x128xf32>
    %c0_15 = arith.constant 0 : index
    %c0_16 = arith.constant 0 : index
    %34 = vector.load %arg6[%c0_15, %c0_16] : memref<12x128xf32, #tpu.memory_space<vmem>>, vector<12x128xf32>
    tpu.vector_store %arg6[%c0_15, %c0_16], %33 {strides = array<i32>} : memref<12x128xf32, #tpu.memory_space<vmem>>, vector<12x128xf32>,
    %35 = arith.truncf %33 : vector<12x128xf32> to vector<12x128xbf16>
    %c0_17 = arith.constant 0 : index
    %c0_18 = arith.constant 0 : index
    %36 = vector.load %arg4[%c0_17, %c0_18] : memref<128x128xbf16, #tpu.memory_space<vmem>>, vector<128x128xbf16>
    %cst_19 = arith.constant dense<0.000000e+00> : vector<12x128xf32>
    %37 = tpu.matmul %35, %36, %cst_19 {dimension_numbers = #tpu.dot_dimension_numbers<[1], [0], [0], [1], [0, 0, 1, 1], [], []>} : vector<12x128xbf16>, vector<128x128xbf16>, vector<12x128xf32> -> vector<12x128xf32>
    %c0_20 = arith.constant 0 : index
    %c0_21 = arith.constant 0 : index
    %38 = vector.load %arg5[%c0_20, %c0_21] : memref<1x128xf32, #tpu.memory_space<vmem>>, vector<1x128xf32>
    %39 = vector.broadcast %38 : vector<1x128xf32> to vector<12x128xf32>
    %40 = arith.addf %37, %39 : vector<12x128xf32>
    %c0_22 = arith.constant 0 : index
    %c0_23 = arith.constant 0 : index
    %41 = vector.load %arg7[%c0_22, %c0_23] : memref<12x128xf32, #tpu.memory_space<vmem>>, vector<12x128xf32>
    tpu.vector_store %arg7[%c0_22, %c0_23], %40 {strides = array<i32>} : memref<12x128xf32, #tpu.memory_space<vmem>>, vector<12x128xf32>,
    return
  }
}

</mosaic_0001>

<llo_original>
// kernel: latent_predictor.1
$region0: #{latent_predictor.1}
  #allocation0 [shape = 'u32[]', space=smem, size = 0x4, offset = 0x4, fixed_abs, tag = 'smem constant byte address 0x4 - core index']
  #allocation1 [shape = 'u32[72,128]{1,0:T(1,128)}', space=vmem, size = 0x9000, scoped, tag = 'internal scratch']
  %s0 = inlined_call_operand.vmem [shape: f32[12,1024], index: 0, kind: input, shape index: {}]
  %s1 = inlined_call_operand.vmem [shape: bf16[1024,128], index: 1, kind: input, shape index: {}]
  %s2 = inlined_call_operand.vmem [shape: f32[1,128], index: 2, kind: input, shape index: {}]
  %s3 = inlined_call_operand.vmem [shape: f32[1,128], index: 3, kind: input, shape index: {}]
  %s4 = inlined_call_operand.vmem [shape: bf16[128,128], index: 4, kind: input, shape index: {}]
  %s5 = inlined_call_operand.vmem [shape: f32[1,128], index: 5, kind: input, shape index: {}]
  %s6 = inlined_call_operand.hbm [shape: f32[12,128], index: 6, kind: output, shape index: {0}]
  %s7 = inlined_call_operand.vmem [shape: f32[12,128], index: 7, kind: output, shape index: {1}]
  %8 = xla_tuple %s6, %s7
  %s9 = sld [smem:[#allocation0]]
  $region42: #{latent_predictor.1} parent=0
    _
  %s11 = ssub.s32 1, %s9
  %s12 = scalar_select 0, %s11, %s9
  $region1: #{latent_predictor.1} parent=0
    #allocation2 [shape = 'u8[8192]{0}', space=vmem, size = 0x2000, scoped, tag = 'output window, operand 0, single buffered']
    #allocation3 [shape = 's32[1]{0}', space=sflag, size = 0x4, scoped, tag = 'scoped memory for latent_predictor.1']
    %13 = vsyncpa [#allocation3], 0
    // Predicated region
    $region2: #{latent_predictor.1} parent=1 // pred_check
      _
    $region3: #{latent_predictor.1} parent=1 // pred_check_branch
      %15 = sbr.rel (0) target = $region5
    $region4: #{latent_predictor.1} parent=1 // pred_region
      _
    $region5: #{latent_predictor.1} parent=1 // pred_fallthru
      _
    // Predicated region
    $region6: #{latent_predictor.1} parent=1 // pred_check
      _
    $region7: #{latent_predictor.1} parent=1 // pred_check_branch
      %17 = sbr.rel (0) target = $region9
    $region8: #{latent_predictor.1} parent=1 // pred_region
      _
    $region9: #{latent_predictor.1} parent=1 // pred_fallthru
      _
    // Predicated region
    $region10: #{latent_predictor.1} parent=1 // pred_check
      _
    $region11: #{latent_predictor.1} parent=1 // pred_check_branch
      %19 = sbr.rel (0) target = $region13
    $region12: #{latent_predictor.1} parent=1 // pred_region
      _
    $region13: #{latent_predictor.1} parent=1 // pred_fallthru
      _
    // Predicated region
    $region14: #{latent_predictor.1} parent=1 // pred_check
      _
    $region15: #{latent_predictor.1} parent=1 // pred_check_branch
      %21 = sbr.rel (0) target = $region17
    $region16: #{latent_predictor.1} parent=1 // pred_region
      _
    $region17: #{latent_predictor.1} parent=1 // pred_fallthru
      _
    // Predicated region
    $region18: #{latent_predictor.1} parent=1 // pred_check
      _
    $region19: #{latent_predictor.1} parent=1 // pred_check_branch
      %23 = sbr.rel (0) target = $region21
    $region20: #{latent_predictor.1} parent=1 // pred_region
      _
    $region21: #{latent_predictor.1} parent=1 // pred_fallthru
      _
    // Predicated region
    $region22: #{latent_predictor.1} parent=1 // pred_check
      _
    $region23: #{latent_predictor.1} parent=1 // pred_check_branch
      %25 = sbr.rel (0) target = $region25
    $region24: #{latent_predictor.1} parent=1 // pred_region
      _
    $region25: #{latent_predictor.1} parent=1 // pred_fallthru
      _
    %v26 = vld [vmem:[%s0] sm:$0xff]
    %v27 = vld [vmem:[%s0 + $0x8] sm:$0xff]
    %v28 = vld [vmem:[%s0 + $0x10] sm:$0xff]
    %v29 = vld [vmem:[%s0 + $0x18] sm:$0xff]
    %v30 = vld [vmem:[%s0 + $0x20] sm:$0xff]
    %v31 = vld [vmem:[%s0 + $0x28] sm:$0xff]
    %v32 = vld [vmem:[%s0 + $0x30] sm:$0xff]
    %v33 = vld [vmem:[%s0 + $0x38] sm:$0xff]
    %v34 = vld [vmem:[%s0 + $0x40] sm:$0xf]
    %v35 = vld [vmem:[%s0 + $0x48] sm:$0xf]
    %v36 = vld [vmem:[%s0 + $0x50] sm:$0xf]
    %v37 = vld [vmem:[%s0 + $0x58] sm:$0xf]
    %v38 = vld [vmem:[%s0 + $0x60] sm:$0xf]
    %v39 = vld [vmem:[%s0 + $0x68] sm:$0xf]
    %v40 = vld [vmem:[%s0 + $0x70] sm:$0xf]
    %v41 = vld [vmem:[%s0 + $0x78] sm:$0xf]
    %v42 = vpack.c.bf16 %v34, %v26
    %v43 = vpack.c.bf16 %v35, %v27
    %v44 = vpack.c.bf16 %v36, %v28
    %v45 = vpack.c.bf16 %v37, %v29
    %v46 = vpack.c.bf16 %v38, %v30
    %v47 = vpack.c.bf16 %v39, %v31
    %v48 = vpack.c.bf16 %v40, %v32
    %v49 = vpack.c.bf16 %v41, %v33
    %v50 = vld [vmem:[%s1] sm:$0xf]
    %v51 = vld [vmem:[%s1 + $0x4] sm:$0xf]
    %v52 = vld [vmem:[%s1 + $0x8] sm:$0xf]
    %v53 = vld [vmem:[%s1 + $0xc] sm:$0xf]
    %v54 = vld [vmem:[%s1 + $0x10] sm:$0xf]
    %v55 = vld [vmem:[%s1 + $0x14] sm:$0xf]
    %v56 = vld [vmem:[%s1 + $0x18] sm:$0xf]
    %v57 = vld [vmem:[%s1 + $0x1c] sm:$0xf]
    %v58 = vld [vmem:[%s1 + $0x20] sm:$0xf]
    %v59 = vld [vmem:[%s1 + $0x24] sm:$0xf]
    %v60 = vld [vmem:[%s1 + $0x28] sm:$0xf]
    %v61 = vld [vmem:[%s1 + $0x2c] sm:$0xf]
    %v62 = vld [vmem:[%s1 + $0x30] sm:$0xf]
    %v63 = vld [vmem:[%s1 + $0x34] sm:$0xf]
    %v64 = vld [vmem:[%s1 + $0x38] sm:$0xf]
    %v65 = vld [vmem:[%s1 + $0x3c] sm:$0xf]
    %v66 = vld [vmem:[%s1 + $0x40] sm:$0xf]
    %v67 = vld [vmem:[%s1 + $0x44] sm:$0xf]
    %v68 = vld [vmem:[%s1 + $0x48] sm:$0xf]
    %v69 = vld [vmem:[%s1 + $0x4c] sm:$0xf]
    %v70 = vld [vmem:[%s1 + $0x50] sm:$0xf]
    %v71 = vld [vmem:[%s1 + $0x54] sm:$0xf]
    %v72 = vld [vmem:[%s1 + $0x58] sm:$0xf]
    %v73 = vld [vmem:[%s1 + $0x5c] sm:$0xf]
    %v74 = vld [vmem:[%s1 + $0x60] sm:$0xf]
    %v75 = vld [vmem:[%s1 + $0x64] sm:$0xf]
    %v76 = vld [vmem:[%s1 + $0x68] sm:$0xf]
    %v77 = vld [vmem:[%s1 + $0x6c] sm:$0xf]
    %v78 = vld [vmem:[%s1 + $0x70] sm:$0xf]
    %v79 = vld [vmem:[%s1 + $0x74] sm:$0xf]
    %v80 = vld [vmem:[%s1 + $0x78] sm:$0xf]
    %v81 = vld [vmem:[%s1 + $0x7c] sm:$0xf]
    %v82 = vld [vmem:[%s1 + $0x80] sm:$0xf]
    %v83 = vld [vmem:[%s1 + $0x84] sm:$0xf]
    %v84 = vld [vmem:[%s1 + $0x88] sm:$0xf]
    %v85 = vld [vmem:[%s1 + $0x8c] sm:$0xf]
    %v86 = vld [vmem:[%s1 + $0x90] sm:$0xf]
    %v87 = vld [vmem:[%s1 + $0x94] sm:$0xf]
    %v88 = vld [vmem:[%s1 + $0x98] sm:$0xf]
    %v89 = vld [vmem:[%s1 + $0x9c] sm:$0xf]
    %v90 = vld [vmem:[%s1 + $0xa0] sm:$0xf]
    %v91 = vld [vmem:[%s1 + $0xa4] sm:$0xf]
    %v92 = vld [vmem:[%s1 + $0xa8] sm:$0xf]
    %v93 = vld [vmem:[%s1 + $0xac] sm:$0xf]
    %v94 = vld [vmem:[%s1 + $0xb0] sm:$0xf]
    %v95 = vld [vmem:[%s1 + $0xb4] sm:$0xf]
    %v96 = vld [vmem:[%s1 + $0xb8] sm:$0xf]
    %v97 = vld [vmem:[%s1 + $0xbc] sm:$0xf]
    %v98 = vld [vmem:[%s1 + $0xc0] sm:$0xf]
    %v99 = vld [vmem:[%s1 + $0xc4] sm:$0xf]
    %v100 = vld [vmem:[%s1 + $0xc8] sm:$0xf]
    %v101 = vld [vmem:[%s1 + $0xcc] sm:$0xf]
    %v102 = vld [vmem:[%s1 + $0xd0] sm:$0xf]
    %v103 = vld [vmem:[%s1 + $0xd4] sm:$0xf]
    %v104 = vld [vmem:[%s1 + $0xd8] sm:$0xf]
    %v105 = vld [vmem:[%s1 + $0xdc] sm:$0xf]
    %v106 = vld [vmem:[%s1 + $0xe0] sm:$0xf]
    %v107 = vld [vmem:[%s1 + $0xe4] sm:$0xf]
    %v108 = vld [vmem:[%s1 + $0xe8] sm:$0xf]
    %v109 = vld [vmem:[%s1 + $0xec] sm:$0xf]
    %v110 = vld [vmem:[%s1 + $0xf0] sm:$0xf]
    %v111 = vld [vmem:[%s1 + $0xf4] sm:$0xf]
    %v112 = vld [vmem:[%s1 + $0xf8] sm:$0xf]
    %v113 = vld [vmem:[%s1 + $0xfc] sm:$0xf]
    %v114 = vld [vmem:[%s1 + $0x100] sm:$0xf]
    %v115 = vld [vmem:[%s1 + $0x104] sm:$0xf]
    %v116 = vld [vmem:[%s1 + $0x108] sm:$0xf]
    %v117 = vld [vmem:[%s1 + $0x10c] sm:$0xf]
    %v118 = vld [vmem:[%s1 + $0x110] sm:$0xf]
    %v119 = vld [vmem:[%s1 + $0x114] sm:$0xf]
    %v120 = vld [vmem:[%s1 + $0x118] sm:$0xf]
    %v121 = vld [vmem:[%s1 + $0x11c] sm:$0xf]
    %v122 = vld [vmem:[%s1 + $0x120] sm:$0xf]
    %v123 = vld [vmem:[%s1 + $0x124] sm:$0xf]
    %v124 = vld [vmem:[%s1 + $0x128] sm:$0xf]
    %v125 = vld [vmem:[%s1 + $0x12c] sm:$0xf]
    %v126 = vld [vmem:[%s1 + $0x130] sm:$0xf]
    %v127 = vld [vmem:[%s1 + $0x134] sm:$0xf]
    %v128 = vld [vmem:[%s1 + $0x138] sm:$0xf]
    %v129 = vld [vmem:[%s1 + $0x13c] sm:$0xf]
    %v130 = vld [vmem:[%s1 + $0x140] sm:$0xf]
    %v131 = vld [vmem:[%s1 + $0x144] sm:$0xf]
    %v132 = vld [vmem:[%s1 + $0x148] sm:$0xf]
    %v133 = vld [vmem:[%s1 + $0x14c] sm:$0xf]
    %v134 = vld [vmem:[%s1 + $0x150] sm:$0xf]
    %v135 = vld [vmem:[%s1 + $0x154] sm:$0xf]
    %v136 = vld [vmem:[%s1 + $0x158] sm:$0xf]
    %v137 = vld [vmem:[%s1 + $0x15c] sm:$0xf]
    %v138 = vld [vmem:[%s1 + $0x160] sm:$0xf]
    %v139 = vld [vmem:[%s1 + $0x164] sm:$0xf]
    %v140 = vld [vmem:[%s1 + $0x168] sm:$0xf]
    %v141 = vld [vmem:[%s1 + $0x16c] sm:$0xf]
    %v142 = vld [vmem:[%s1 + $0x170] sm:$0xf]
    %v143 = vld [vmem:[%s1 + $0x174] sm:$0xf]
    %v144 = vld [vmem:[%s1 + $0x178] sm:$0xf]
    %v145 = vld [vmem:[%s1 + $0x17c] sm:$0xf]
    %v146 = vld [vmem:[%s1 + $0x180] sm:$0xf]
    %v147 = vld [vmem:[%s1 + $0x184] sm:$0xf]
    %v148 = vld [vmem:[%s1 + $0x188] sm:$0xf]
    %v149 = vld [vmem:[%s1 + $0x18c] sm:$0xf]
    %v150 = vld [vmem:[%s1 + $0x190] sm:$0xf]
    %v151 = vld [vmem:[%s1 + $0x194] sm:$0xf]
    %v152 = vld [vmem:[%s1 + $0x198] sm:$0xf]
    %v153 = vld [vmem:[%s1 + $0x19c] sm:$0xf]
    %v154 = vld [vmem:[%s1 + $0x1a0] sm:$0xf]
    %v155 = vld [vmem:[%s1 + $0x1a4] sm:$0xf]
    %v156 = vld [vmem:[%s1 + $0x1a8] sm:$0xf]
    %v157 = vld [vmem:[%s1 + $0x1ac] sm:$0xf]
    %v158 = vld [vmem:[%s1 + $0x1b0] sm:$0xf]
    %v159 = vld [vmem:[%s1 + $0x1b4] sm:$0xf]
    %v160 = vld [vmem:[%s1 + $0x1b8] sm:$0xf]
    %v161 = vld [vmem:[%s1 + $0x1bc] sm:$0xf]
    %v162 = vld [vmem:[%s1 + $0x1c0] sm:$0xf]
    %v163 = vld [vmem:[%s1 + $0x1c4] sm:$0xf]
    %v164 = vld [vmem:[%s1 + $0x1c8] sm:$0xf]
    %v165 = vld [vmem:[%s1 + $0x1cc] sm:$0xf]
    %v166 = vld [vmem:[%s1 + $0x1d0] sm:$0xf]
    %v167 = vld [vmem:[%s1 + $0x1d4] sm:$0xf]
    %v168 = vld [vmem:[%s1 + $0x1d8] sm:$0xf]
    %v169 = vld [vmem:[%s1 + $0x1dc] sm:$0xf]
    %v170 = vld [vmem:[%s1 + $0x1e0] sm:$0xf]
    %v171 = vld [vmem:[%s1 + $0x1e4] sm:$0xf]
    %v172 = vld [vmem:[%s1 + $0x1e8] sm:$0xf]
    %v173 = vld [vmem:[%s1 + $0x1ec] sm:$0xf]
    %v174 = vld [vmem:[%s1 + $0x1f0] sm:$0xf]
    %v175 = vld [vmem:[%s1 + $0x1f4] sm:$0xf]
    %v176 = vld [vmem:[%s1 + $0x1f8] sm:$0xf]
    %v177 = vld [vmem:[%s1 + $0x1fc] sm:$0xf]
    %v306 = vunpack.c.l.b16 %v50
    %v307 = vunpack.c.l.b16 %v51
    %v308 = vunpack.c.l.b16 %v52
    %v309 = vunpack.c.l.b16 %v53
    %v310 = vunpack.c.l.b16 %v54
    %v311 = vunpack.c.l.b16 %v55
    %v312 = vunpack.c.l.b16 %v56
    %v313 = vunpack.c.l.b16 %v57
    %v314 = vunpack.c.l.b16 %v58
    %v315 = vunpack.c.l.b16 %v59
    %v316 = vunpack.c.l.b16 %v60
    %v317 = vunpack.c.l.b16 %v61
    %v318 = vunpack.c.l.b16 %v62
    %v319 = vunpack.c.l.b16 %v63
    %v320 = vunpack.c.l.b16 %v64
    %v321 = vunpack.c.l.b16 %v65
    %v322 = vunpack.c.l.b16 %v66
    %v323 = vunpack.c.l.b16 %v67
    %v324 = vunpack.c.l.b16 %v68
    %v325 = vunpack.c.l.b16 %v69
    %v326 = vunpack.c.l.b16 %v70
    %v327 = vunpack.c.l.b16 %v71
    %v328 = vunpack.c.l.b16 %v72
    %v329 = vunpack.c.l.b16 %v73
    %v330 = vunpack.c.l.b16 %v74
    %v331 = vunpack.c.l.b16 %v75
    %v332 = vunpack.c.l.b16 %v76
    %v333 = vunpack.c.l.b16 %v77
    %v334 = vunpack.c.l.b16 %v78
    %v335 = vunpack.c.l.b16 %v79
    %v336 = vunpack.c.l.b16 %v80
    %v337 = vunpack.c.l.b16 %v81
    %v338 = vunpack.c.l.b16 %v82
    %v339 = vunpack.c.l.b16 %v83
    %v340 = vunpack.c.l.b16 %v84
    %v341 = vunpack.c.l.b16 %v85
    %v342 = vunpack.c.l.b16 %v86
    %v343 = vunpack.c.l.b16 %v87
    %v344 = vunpack.c.l.b16 %v88
    %v345 = vunpack.c.l.b16 %v89
    %v346 = vunpack.c.l.b16 %v90
    %v347 = vunpack.c.l.b16 %v91
    %v348 = vunpack.c.l.b16 %v92
    %v349 = vunpack.c.l.b16 %v93
    %v350 = vunpack.c.l.b16 %v94
    %v351 = vunpack.c.l.b16 %v95
    %v352 = vunpack.c.l.b16 %v96
    %v353 = vunpack.c.l.b16 %v97
    %v354 = vunpack.c.l.b16 %v98
    %v355 = vunpack.c.l.b16 %v99
    %v356 = vunpack.c.l.b16 %v100
    %v357 = vunpack.c.l.b16 %v101
    %v358 = vunpack.c.l.b16 %v102
    %v359 = vunpack.c.l.b16 %v103
    %v360 = vunpack.c.l.b16 %v104
    %v361 = vunpack.c.l.b16 %v105
    %v362 = vunpack.c.l.b16 %v106
    %v363 = vunpack.c.l.b16 %v107
    %v364 = vunpack.c.l.b16 %v108
    %v365 = vunpack.c.l.b16 %v109
    %v366 = vunpack.c.l.b16 %v110
    %v367 = vunpack.c.l.b16 %v111
    %v368 = vunpack.c.l.b16 %v112
    %v369 = vunpack.c.l.b16 %v113
    %v370 = vunpack.c.l.b16 %v114
    %v371 = vunpack.c.l.b16 %v115
    %v372 = vunpack.c.l.b16 %v116
    %v373 = vunpack.c.l.b16 %v117
    %v374 = vunpack.c.l.b16 %v118
    %v375 = vunpack.c.l.b16 %v119
    %v376 = vunpack.c.l.b16 %v120
    %v377 = vunpack.c.l.b16 %v121
    %v378 = vunpack.c.l.b16 %v122
    %v379 = vunpack.c.l.b16 %v123
    %v380 = vunpack.c.l.b16 %v124
    %v381 = vunpack.c.l.b16 %v125
    %v382 = vunpack.c.l.b16 %v126
    %v383 = vunpack.c.l.b16 %v127
    %v384 = vunpack.c.l.b16 %v128
    %v385 = vunpack.c.l.b16 %v129
    %v386 = vunpack.c.l.b16 %v130
    %v387 = vunpack.c.l.b16 %v131
    %v388 = vunpack.c.l.b16 %v132
    %v389 = vunpack.c.l.b16 %v133
    %v390 = vunpack.c.l.b16 %v134
    %v391 = vunpack.c.l.b16 %v135
    %v392 = vunpack.c.l.b16 %v136
    %v393 = vunpack.c.l.b16 %v137
    %v394 = vunpack.c.l.b16 %v138
    %v395 = vunpack.c.l.b16 %v139
    %v396 = vunpack.c.l.b16 %v140
    %v397 = vunpack.c.l.b16 %v141
    %v398 = vunpack.c.l.b16 %v142
    %v399 = vunpack.c.l.b16 %v143
    %v400 = vunpack.c.l.b16 %v144
    %v401 = vunpack.c.l.b16 %v145
    %v402 = vunpack.c.l.b16 %v146
    %v403 = vunpack.c.l.b16 %v147
    %v404 = vunpack.c.l.b16 %v148
    %v405 = vunpack.c.l.b16 %v149
    %v406 = vunpack.c.l.b16 %v150
    %v407 = vunpack.c.l.b16 %v151
    %v408 = vunpack.c.l.b16 %v152
    %v409 = vunpack.c.l.b16 %v153
    %v410 = vunpack.c.l.b16 %v154
    %v411 = vunpack.c.l.b16 %v155
    %v412 = vunpack.c.l.b16 %v156
    %v413 = vunpack.c.l.b16 %v157
    %v414 = vunpack.c.l.b16 %v158
    %v415 = vunpack.c.l.b16 %v159
    %v416 = vunpack.c.l.b16 %v160
    %v417 = vunpack.c.l.b16 %v161
    %v418 = vunpack.c.l.b16 %v162
    %v419 = vunpack.c.l.b16 %v163
    %v420 = vunpack.c.l.b16 %v164
    %v421 = vunpack.c.l.b16 %v165
    %v422 = vunpack.c.l.b16 %v166
    %v423 = vunpack.c.l.b16 %v167
    %v424 = vunpack.c.l.b16 %v168
    %v425 = vunpack.c.l.b16 %v169
    %v426 = vunpack.c.l.b16 %v170
    %v427 = vunpack.c.l.b16 %v171
    %v428 = vunpack.c.l.b16 %v172
    %v429 = vunpack.c.l.b16 %v173
    %v430 = vunpack.c.l.b16 %v174
    %v431 = vunpack.c.l.b16 %v175
    %v432 = vunpack.c.l.b16 %v176
    %v433 = vunpack.c.l.b16 %v177
    %v434 = vpack.c.b16 %v307, %v306
    %v435 = vpack.c.b16 %v309, %v308
    %v436 = vpack.c.b16 %v311, %v310
    %v437 = vpack.c.b16 %v313, %v312
    %v438 = vpack.c.b16 %v315, %v314
    %v439 = vpack.c.b16 %v317, %v316
    %v440 = vpack.c.b16 %v319, %v318
    %v441 = vpack.c.b16 %v321, %v320
    %v442 = vpack.c.b16 %v323, %v322
    %v443 = vpack.c.b16 %v325, %v324
    %v444 = vpack.c.b16 %v327, %v326
    %v445 = vpack.c.b16 %v329, %v328
    %v446 = vpack.c.b16 %v331, %v330
    %v447 = vpack.c.b16 %v333, %v332
    %v448 = vpack.c.b16 %v335, %v334
    %v449 = vpack.c.b16 %v337, %v336
    %v450 = vpack.c.b16 %v339, %v338
    %v451 = vpack.c.b16 %v341, %v340
    %v452 = vpack.c.b16 %v343, %v342
    %v453 = vpack.c.b16 %v345, %v344
    %v454 = vpack.c.b16 %v347, %v346
    %v455 = vpack.c.b16 %v349, %v348
    %v456 = vpack.c.b16 %v351, %v350
    %v457 = vpack.c.b16 %v353, %v352
    %v458 = vpack.c.b16 %v355, %v354
    %v459 = vpack.c.b16 %v357, %v356
    %v460 = vpack.c.b16 %v359, %v358
    %v461 = vpack.c.b16 %v361, %v360
    %v462 = vpack.c.b16 %v363, %v362
    %v463 = vpack.c.b16 %v365, %v364
    %v464 = vpack.c.b16 %v367, %v366
    %v465 = vpack.c.b16 %v369, %v368
    %v466 = vpack.c.b16 %v371, %v370
    %v467 = vpack.c.b16 %v373, %v372
    %v468 = vpack.c.b16 %v375, %v374
    %v469 = vpack.c.b16 %v377, %v376
    %v470 = vpack.c.b16 %v379, %v378
    %v471 = vpack.c.b16 %v381, %v380
    %v472 = vpack.c.b16 %v383, %v382
    %v473 = vpack.c.b16 %v385, %v384
    %v474 = vpack.c.b16 %v387, %v386
    %v475 = vpack.c.b16 %v389, %v388
    %v476 = vpack.c.b16 %v391, %v390
    %v477 = vpack.c.b16 %v393, %v392
    %v478 = vpack.c.b16 %v395, %v394
    %v479 = vpack.c.b16 %v397, %v396
    %v480 = vpack.c.b16 %v399, %v398
    %v481 = vpack.c.b16 %v401, %v400
    %v482 = vpack.c.b16 %v403, %v402
    %v483 = vpack.c.b16 %v405, %v404
    %v484 = vpack.c.b16 %v407, %v406
    %v485 = vpack.c.b16 %v409, %v408
    %v486 = vpack.c.b16 %v411, %v410
    %v487 = vpack.c.b16 %v413, %v412
    %v488 = vpack.c.b16 %v415, %v414
    %v489 = vpack.c.b16 %v417, %v416
    %v490 = vpack.c.b16 %v419, %v418
    %v491 = vpack.c.b16 %v421, %v420
    %v492 = vpack.c.b16 %v423, %v422
    %v493 = vpack.c.b16 %v425, %v424
    %v494 = vpack.c.b16 %v427, %v426
    %v495 = vpack.c.b16 %v429, %v428
    %v496 = vpack.c.b16 %v431, %v430
    %v497 = vpack.c.b16 %v433, %v432
    %562 = vmatpush.bf16.msra.mxu0 %v441
    %563 = vmatpush.bf16.msra.mxu0 %v440
    %564 = vmatpush.bf16.msra.mxu0 %v439
    %565 = vmatpush.bf16.msra.mxu0 %v438
    %566 = vmatpush.bf16.msra.mxu0 %v437
    %567 = vmatpush.bf16.msra.mxu0 %v436
    %568 = vmatpush.bf16.msra.mxu0 %v435
    %569 = vmatpush.bf16.msra.mxu0 %v434
    %570 = vmatmul.bf16.gmra.mxu0 %v42
    %v571 = vpop.f32.mrf.mxu0
    %v572 = vadd.f32 0.0, %v571
    %v573 = vpop.f32.mrf.mxu0
    %v574 = vadd.f32 0.0, %v573
    %575 = vdwg.mxu0
    %576 = vmatpush.bf16.msra.mxu0 %v449
    %577 = vmatpush.bf16.msra.mxu0 %v448
    %578 = vmatpush.bf16.msra.mxu0 %v447
    %579 = vmatpush.bf16.msra.mxu0 %v446
    %580 = vmatpush.bf16.msra.mxu0 %v445
    %581 = vmatpush.bf16.msra.mxu0 %v444
    %582 = vmatpush.bf16.msra.mxu0 %v443
    %583 = vmatpush.bf16.msra.mxu0 %v442
    %584 = vmatmul.bf16.gmra.mxu0 %v43
    %v585 = vpop.f32.mrf.mxu0
    %v586 = vadd.f32 %v572, %v585
    %v587 = vpop.f32.mrf.mxu0
    %v588 = vadd.f32 %v574, %v587
    %589 = vdwg.mxu0
    %590 = vmatpush.bf16.msra.mxu0 %v457
    %591 = vmatpush.bf16.msra.mxu0 %v456
    %592 = vmatpush.bf16.msra.mxu0 %v455
    %593 = vmatpush.bf16.msra.mxu0 %v454
    %594 = vmatpush.bf16.msra.mxu0 %v453
    %595 = vmatpush.bf16.msra.mxu0 %v452
    %596 = vmatpush.bf16.msra.mxu0 %v451
    %597 = vmatpush.bf16.msra.mxu0 %v450
    %598 = vmatmul.bf16.gmra.mxu0 %v44
    %v599 = vpop.f32.mrf.mxu0
    %v600 = vadd.f32 %v586, %v599
    %v601 = vpop.f32.mrf.mxu0
    %v602 = vadd.f32 %v588, %v601
    %603 = vdwg.mxu0
    %604 = vmatpush.bf16.msra.mxu0 %v465
    %605 = vmatpush.bf16.msra.mxu0 %v464
    %606 = vmatpush.bf16.msra.mxu0 %v463
    %607 = vmatpush.bf16.msra.mxu0 %v462
    %608 = vmatpush.bf16.msra.mxu0 %v461
    %609 = vmatpush.bf16.msra.mxu0 %v460
    %610 = vmatpush.bf16.msra.mxu0 %v459
    %611 = vmatpush.bf16.msra.mxu0 %v458
    %612 = vmatmul.bf16.gmra.mxu0 %v45
    %v613 = vpop.f32.mrf.mxu0
    %v614 = vadd.f32 %v600, %v613
    %v615 = vpop.f32.mrf.mxu0
    %v616 = vadd.f32 %v602, %v615
    %617 = vdwg.mxu0
    %618 = vmatpush.bf16.msra.mxu0 %v473
    %619 = vmatpush.bf16.msra.mxu0 %v472
    %620 = vmatpush.bf16.msra.mxu0 %v471
    %621 = vmatpush.bf16.msra.mxu0 %v470
    %622 = vmatpush.bf16.msra.mxu0 %v469
    %623 = vmatpush.bf16.msra.mxu0 %v468
    %624 = vmatpush.bf16.msra.mxu0 %v467
    %625 = vmatpush.bf16.msra.mxu0 %v466
    %626 = vmatmul.bf16.gmra.mxu0 %v46
    %v627 = vpop.f32.mrf.mxu0
    %v628 = vadd.f32 %v614, %v627
    %v629 = vpop.f32.mrf.mxu0
    %v630 = vadd.f32 %v616, %v629
    %631 = vdwg.mxu0
    %632 = vmatpush.bf16.msra.mxu0 %v481
    %633 = vmatpush.bf16.msra.mxu0 %v480
    %634 = vmatpush.bf16.msra.mxu0 %v479
    %635 = vmatpush.bf16.msra.mxu0 %v478
    %636 = vmatpush.bf16.msra.mxu0 %v477
    %637 = vmatpush.bf16.msra.mxu0 %v476
    %638 = vmatpush.bf16.msra.mxu0 %v475
    %639 = vmatpush.bf16.msra.mxu0 %v474
    %640 = vmatmul.bf16.gmra.mxu0 %v47
    %v641 = vpop.f32.mrf.mxu0
    %v642 = vadd.f32 %v628, %v641
    %v643 = vpop.f32.mrf.mxu0
    %v644 = vadd.f32 %v630, %v643
    %645 = vdwg.mxu0
    %646 = vmatpush.bf16.msra.mxu0 %v489
    %647 = vmatpush.bf16.msra.mxu0 %v488
    %648 = vmatpush.bf16.msra.mxu0 %v487
    %649 = vmatpush.bf16.msra.mxu0 %v486
    %650 = vmatpush.bf16.msra.mxu0 %v485
    %651 = vmatpush.bf16.msra.mxu0 %v484
    %652 = vmatpush.bf16.msra.mxu0 %v483
    %653 = vmatpush.bf16.msra.mxu0 %v482
    %654 = vmatmul.bf16.gmra.mxu0 %v48
    %v655 = vpop.f32.mrf.mxu0
    %v656 = vadd.f32 %v642, %v655
    %v657 = vpop.f32.mrf.mxu0
    %v658 = vadd.f32 %v644, %v657
    %659 = vdwg.mxu0
    %660 = vmatpush.bf16.msra.mxu0 %v497
    %661 = vmatpush.bf16.msra.mxu0 %v496
    %662 = vmatpush.bf16.msra.mxu0 %v495
    %663 = vmatpush.bf16.msra.mxu0 %v494
    %664 = vmatpush.bf16.msra.mxu0 %v493
    %665 = vmatpush.bf16.msra.mxu0 %v492
    %666 = vmatpush.bf16.msra.mxu0 %v491
    %667 = vmatpush.bf16.msra.mxu0 %v490
    %668 = vmatmul.bf16.gmra.mxu0 %v49
    %v669 = vpop.f32.mrf.mxu0
    %v670 = vadd.f32 %v656, %v669
    %v671 = vpop.f32.mrf.mxu0
    %v672 = vadd.f32 %v658, %v671
    %673 = vdwg.mxu0
    %vm674 = vcmask 1043456
    %v675 = vsel %vm674, %v672, 0.0
    %v676 = vadd.f32 %v670, %v675
    %v677 = vrot.slane %v676, 4
    %v678 = vadd.f32 %v676, %v677
    %v679 = vrot.slane %v678, 2
    %v680 = vadd.f32 %v678, %v679
    %v681 = vrot.slane %v680, 1
    %v682 = vadd.f32 %v680, %v681
    %v683 = vrcp.pop 12.0
    %v684 = vmul.f32 12.0, %v683
    %v685 = vsub.f32 1.0, %v684
    %v686 = vmul.f32 %v683, %v685
    %v687 = vadd.f32 %v683, %v686
    %vm688 = vweird.f32 %v683
    %v689 = vsel %vm688, %v683, %v687
    %v690 = vmul.f32 %v682, %v689
    %v691 = vmul.f32 %v670, %v670
    %v692 = vmul.f32 %v672, %v672
    %v693 = vsel %vm674, %v692, 0.0
    %v694 = vadd.f32 %v691, %v693
    %v695 = vrot.slane %v694, 4
    %v696 = vadd.f32 %v694, %v695
    %v697 = vrot.slane %v696, 2
    %v698 = vadd.f32 %v696, %v697
    %v699 = vrot.slane %v698, 1
    %v700 = vadd.f32 %v698, %v699
    %v701 = vmul.f32 %v700, %v689
    %v702 = vmul.f32 %v690, %v690
    %v703 = vsub.f32 %v701, %v702
    %v704 = vmax.f32 %v703, 0.0
    %v705 = vld [vmem:[%s2] sm:$0x1]
    %v706 = vadd.f32 %v704, 1e-05
    %v707 = vrsqrt.pop %v706
    %v708 = vmul.f32 %v707, %v706
    %v709 = vmul.f32 %v708, %v707
    %v710 = vmul.f32 0.5, %v709
    %v711 = vsub.f32 1.5, %v710
    %v712 = vmul.f32 %v707, %v711
    %vm713 = vweird.f32 %v706
    %vm714 = vweird.f32 %v707
    %vm715 = vmor %vm713, %vm714
    %v716 = vsel %vm715, %v707, %v712
    %v717 = vmul.f32 %v705, %v716
    %v718 = vld [vmem:[%s3] sm:$0x1]
    %v719 = vmul.f32 %v690, %v717
    %v720 = vsub.f32 %v718, %v719
    %v722 = vperm.slane %v717, 0
    %v724 = vmul.f32 %v670, %v722
    %v725 = vmul.f32 %v672, %v722
    %v727 = vperm.slane %v720, 0
    %v729 = vadd.f32 %v724, %v727
    %v730 = vadd.f32 %v725, %v727
    %vm731 = vcmp.gt.f32.partialorder %v729, 0.0
    %vm732 = vcmp.gt.f32.partialorder %v730, 0.0
    %v733 = vmul.f32 %v729, 0.2
    %v734 = vmul.f32 %v730, 0.2
    %v735 = vsel %vm731, %v729, %v733
    %v736 = vsel %vm732, %v730, %v734
    %737 = vst [vmem:[#allocation2] sm:$0xff] %v735
    %738 = vst [vmem:[#allocation2 + $0x8] sm:$0xf] %v736
    %v739 = vpack.c.bf16 %v736, %v735
    %v740 = vld [vmem:[%s4] sm:$0xf]
    %v741 = vld [vmem:[%s4 + $0x4] sm:$0xf]
    %v742 = vld [vmem:[%s4 + $0x8] sm:$0xf]
    %v743 = vld [vmem:[%s4 + $0xc] sm:$0xf]
    %v744 = vld [vmem:[%s4 + $0x10] sm:$0xf]
    %v745 = vld [vmem:[%s4 + $0x14] sm:$0xf]
    %v746 = vld [vmem:[%s4 + $0x18] sm:$0xf]
    %v747 = vld [vmem:[%s4 + $0x1c] sm:$0xf]
    %v748 = vld [vmem:[%s4 + $0x20] sm:$0xf]
    %v749 = vld [vmem:[%s4 + $0x24] sm:$0xf]
    %v750 = vld [vmem:[%s4 + $0x28] sm:$0xf]
    %v751 = vld [vmem:[%s4 + $0x2c] sm:$0xf]
    %v752 = vld [vmem:[%s4 + $0x30] sm:$0xf]
    %v753 = vld [vmem:[%s4 + $0x34] sm:$0xf]
    %v754 = vld [vmem:[%s4 + $0x38] sm:$0xf]
    %v755 = vld [vmem:[%s4 + $0x3c] sm:$0xf]
    %v756 = vld [vmem:[%s5] sm:$0x1]
    %v758 = vperm.slane %v756, 0
    %v776 = vunpack.c.l.b16 %v740
    %v777 = vunpack.c.l.b16 %v741
    %v778 = vunpack.c.l.b16 %v742
    %v779 = vunpack.c.l.b16 %v743
    %v780 = vunpack.c.l.b16 %v744
    %v781 = vunpack.c.l.b16 %v745
    %v782 = vunpack.c.l.b16 %v746
    %v783 = vunpack.c.l.b16 %v747
    %v784 = vunpack.c.l.b16 %v748
    %v785 = vunpack.c.l.b16 %v749
    %v786 = vunpack.c.l.b16 %v750
    %v787 = vunpack.c.l.b16 %v751
    %v788 = vunpack.c.l.b16 %v752
    %v789 = vunpack.c.l.b16 %v753
    %v790 = vunpack.c.l.b16 %v754
    %v791 = vunpack.c.l.b16 %v755
    %v792 = vpack.c.b16 %v777, %v776
    %v793 = vpack.c.b16 %v779, %v778
    %v794 = vpack.c.b16 %v781, %v780
    %v795 = vpack.c.b16 %v783, %v782
    %v796 = vpack.c.b16 %v785, %v784
    %v797 = vpack.c.b16 %v787, %v786
    %v798 = vpack.c.b16 %v789, %v788
    %v799 = vpack.c.b16 %v791, %v790
    %808 = vmatpush.bf16.msra.mxu0 %v799
    %809 = vmatpush.bf16.msra.mxu0 %v798
    %810 = vmatpush.bf16.msra.mxu0 %v797
    %811 = vmatpush.bf16.msra.mxu0 %v796
    %812 = vmatpush.bf16.msra.mxu0 %v795
    %813 = vmatpush.bf16.msra.mxu0 %v794
    %814 = vmatpush.bf16.msra.mxu0 %v793
    %815 = vmatpush.bf16.msra.mxu0 %v792
    %816 = vmatmul.bf16.gmra.mxu0 %v739
    %v817 = vpop.f32.mrf.mxu0
    %v818 = vadd.f32 %v758, %v817
    %v819 = vpop.f32.mrf.mxu0
    %v820 = vadd.f32 %v758, %v819
    %821 = vdwg.mxu0
    %822 = vst [vmem:[%s7] sm:$0xff] %v818
    %823 = vst [vmem:[%s7 + $0x8] sm:$0xf] %v820
    // Predicated region
    $region26: #{latent_predictor.1} parent=1 // pred_check
      _
    $region27: #{latent_predictor.1} parent=1 // pred_check_branch
      %825 = sbr.rel (0) target = $region29
    $region28: #{latent_predictor.1} parent=1 // pred_region
      %827 = vsyncadd [#allocation3], 0
      %s828 = sshll.u32 [#allocation2], 4
      %s829 = int_to_ptr.vmem [resolvable:$true] %s828
      %s830 = sshll.u32 %s6, 4
      %s831 = int_to_ptr.hbm [resolvable:$true] %s830
      %836 = dma.vmem_to_hbm [thread:$0]  %s829, 256, %s831, [#allocation3], 128, 128, 8
    $region29: #{latent_predictor.1} parent=1 // pred_fallthru
      _
    // Predicated region
    $region30: #{latent_predictor.1} parent=1 // pred_check
      _
    $region31: #{latent_predictor.1} parent=1 // pred_check_branch
      %838 = sbr.rel (0) target = $region33
    $region32: #{latent_predictor.1} parent=1 // pred_region
      _
    $region33: #{latent_predictor.1} parent=1 // pred_fallthru
      _
    // Predicated region
    $region34: #{latent_predictor.1} parent=1 // pred_check
      _
    $region35: #{latent_predictor.1} parent=1 // pred_check_branch
      %840 = sbr.rel (0) target = $region37
    $region36: #{latent_predictor.1} parent=1 // pred_region
      %842 = dma.done [#allocation3], 256
    $region37: #{latent_predictor.1} parent=1 // pred_fallthru
      _
    // Predicated region
    $region38: #{latent_predictor.1} parent=1 // pred_check
      _
    $region39: #{latent_predictor.1} parent=1 // pred_check_branch
      %844 = sbr.rel (0) target = $region41
    $region40: #{latent_predictor.1} parent=1 // pred_region
      _
    $region41: #{latent_predictor.1} parent=1 // pred_fallthru
      _
    %845 = vsyncpa [#allocation3], 1

</llo_original>
